<compile_context>
chip_gen: v5e
topology: v5e:2x2
jax: 0.10.0
libtpu: 0.0.40
codegen_flags: <defaults>
</compile_context>

<pallas_src>
import functools

import jax
import jax.numpy as jnp
from jax.experimental import pallas as pl
from jax.experimental.pallas import tpu as pltpu


def _adjacency_kernel(
    x_ref, y_ref,
    w_in_ref, b_in_ref,
    w_blk_ref, b_blk_ref,
    w_anti_ref, b_anti_ref,
    o_ref,
):
    # ---- input_layer: Linear(2*input -> hidden) on concat(x, y); BN folded into W/b.
    inpt = jnp.concatenate([x_ref[...], y_ref[...]], axis=1)          # bf16, (tile, 2*in)
    h = jnp.dot(inpt, w_in_ref[...], preferred_element_type=jnp.float32) + b_in_ref[...]
    h = jnp.maximum(h, 0.0)                                           # f32 ReLU

    # ---- ResidualBlockSmallBatchNorm (eval):
    #      Linear -> BN(folded) -> ReLU -> Dropout(identity) -> + residual
    t = jnp.dot(h.astype(w_blk_ref.dtype), w_blk_ref[...],
                preferred_element_type=jnp.float32) + b_blk_ref[...]
    t = jnp.maximum(t, 0.0)
    h = h + t                                                         # f32 residual add

    # ---- output_layer + 2-class softmax in closed form:
    #      softmax([l0, l1]) == sigmoid([l0 - l1, l1 - l0]); w_anti/b_anti hold the
    #      column differences, so this is one matmul + elementwise sigmoid
    #      (no cross-lane reductions).
    d = jnp.dot(h.astype(w_anti_ref.dtype), w_anti_ref[...],
                preferred_element_type=jnp.float32) + b_anti_ref[...]
    o_ref[...] = 1.0 / (1.0 + jnp.exp(-d))


@functools.partial(jax.jit, static_argnames=("batch_tile",))
def adjacency_detector_forward(x, y, params, batch_tile=256):
    B, input_size = x.shape
    hidden = params["w_in"].shape[1]
    out_size = params["w_anti"].shape[1]

    batch_tile = min(batch_tile, B)
    # No masking path for a partial last tile.
    assert B % batch_tile == 0, "batch must be a multiple of batch_tile"

    grid = (B // batch_tile,)

    # bf16 MXU operands; halves x/y HBM->VMEM DMA traffic.
    xb = x.astype(jnp.bfloat16)
    yb = y.astype(jnp.bfloat16)

    def row_spec(nfeat):
        return pl.BlockSpec((batch_tile, nfeat), lambda i: (i, 0))

    def full_spec(shape):
        # Grid-invariant (resident) operand.
        return pl.BlockSpec(shape, lambda i: (0, 0))

    in_specs = [
        row_spec(input_size),                 # x tile
        row_spec(input_size),                 # y tile
        full_spec(params["w_in"].shape),      # (2*input, hidden) bf16, BN folded
        full_spec(params["b_in"].shape),      # (1, hidden) f32
        full_spec(params["w_blk"].shape),     # (hidden, hidden) bf16, BN folded
        full_spec(params["b_blk"].shape),     # (1, hidden) f32
        full_spec(params["w_anti"].shape),    # (hidden, 2) bf16
        full_spec(params["b_anti"].shape),    # (1, 2) f32
    ]

    return pl.pallas_call(
        _adjacency_kernel,
        out_shape=jax.ShapeDtypeStruct((B, out_size), jnp.float32),
        grid=grid,
        in_specs=in_specs,
        out_specs=row_spec(out_size),
        compiler_params=pltpu.CompilerParams(
            dimension_semantics=("parallel",),
        ),
    )(
        xb, yb,
        params["w_in"], params["b_in"],
        params["w_blk"], params["b_blk"],
        params["w_anti"], params["b_anti"],
    )


def fold_bn(w_t, b, gamma, beta, mean, var, eps=1e-5):
    """Fold eval-mode BatchNorm1d into the preceding Linear.

    w_t: (in, out) transposed Linear weight; b: (1, out) bias.
    Returns (w_t', b') with  x @ w_t' + b'  ==  BN(x @ w_t + b).
    """
    s = gamma / jnp.sqrt(var + eps)
    return w_t * s, (b - mean) * s + beta


def init_params(key, input_size, hidden_size, output_size):
    """Deterministic parameter init mirroring the PyTorch module's shapes."""
    assert output_size == 2, "closed-form softmax path assumes 2 classes"
    keys = jax.random.split(key, 6)
    eps = 1e-5

    # nn.Linear weights in torch layout (out, in); transpose to (in, out).
    w_in = (jax.random.normal(keys[0], (hidden_size, 2 * input_size), jnp.float32) * 0.02).T
    b_in = jax.random.normal(keys[1], (1, hidden_size), jnp.float32) * 0.02
    w_blk = (jax.random.normal(keys[2], (hidden_size, hidden_size), jnp.float32) * 0.02).T
    b_blk = jax.random.normal(keys[3], (1, hidden_size), jnp.float32) * 0.02
    w_out = (jax.random.normal(keys[4], (output_size, hidden_size), jnp.float32) * 0.02).T
    b_out = jax.random.normal(keys[5], (1, output_size), jnp.float32) * 0.02

    # BatchNorm1d at init (eval): gamma=1, beta=0, running_mean=0, running_var=1.
    # TODO(synk): for a trained checkpoint, fold the actual running stats here.
    ones = jnp.ones((1, hidden_size), jnp.float32)
    zeros = jnp.zeros((1, hidden_size), jnp.float32)
    w_in_f, b_in_f = fold_bn(w_in, b_in, ones, zeros, zeros, ones, eps)
    w_blk_f, b_blk_f = fold_bn(w_blk, b_blk, ones, zeros, zeros, ones, eps)

    # Antisymmetric output weights for the 2-class softmax closed form.
    w_diff = w_out[:, 1:2] - w_out[:, 0:1]          # (hidden, 1)
    b_diff = b_out[:, 1:2] - b_out[:, 0:1]          # (1, 1)
    w_anti = jnp.concatenate([-w_diff, w_diff], axis=1)   # (hidden, 2)
    b_anti = jnp.concatenate([-b_diff, b_diff], axis=1)   # (1, 2)

    return {
        # bf16 MXU operands (accumulation stays f32 in-kernel).
        "w_in": w_in_f.astype(jnp.bfloat16),
        "w_blk": w_blk_f.astype(jnp.bfloat16),
        "w_anti": w_anti.astype(jnp.bfloat16),
        # f32 VPU-path tensors.
        "b_in": b_in_f,
        "b_blk": b_blk_f,
        "b_anti": b_anti,
        # f32 originals, kept only for the reference check (not passed to the kernel).
        "w_out_ref": w_out,
        "b_out_ref": b_out,
    }


def reference_forward(x, y, p):
    """Pure-JAX reference mimicking the kernel's bf16-operand / f32-accumulate math."""
    f32 = lambda a: a.astype(jnp.float32)
    xb, yb = f32(x.astype(jnp.bfloat16)), f32(y.astype(jnp.bfloat16))
    h = jnp.concatenate([xb, yb], axis=1) @ f32(p["w_in"]) + p["b_in"]
    h = jnp.maximum(h, 0.0)
    t = jnp.maximum(f32(h.astype(jnp.bfloat16)) @ f32(p["w_blk"]) + p["b_blk"], 0.0)
    h = h + t
    logits = (f32(h.astype(jnp.bfloat16))
              @ f32(p["w_out_ref"].astype(jnp.bfloat16)) + p["b_out_ref"])
    return jax.nn.softmax(logits, axis=1)


if __name__ == "__main__":
    INPUT_SIZE = 128
    HIDDEN_SIZE = 128
    OUTPUT_SIZE = 2
    BATCH = 256
    TILE = 128   # grid of 2 -> both v7x TensorCores get a tile

    key = jax.random.PRNGKey(0)
    kx, ky, kp = jax.random.split(key, 3)
    x = jax.random.normal(kx, (BATCH, INPUT_SIZE), jnp.float32)
    y = jax.random.normal(ky, (BATCH, INPUT_SIZE), jnp.float32)
    params = init_params(kp, INPUT_SIZE, HIDDEN_SIZE, OUTPUT_SIZE)

    out = adjacency_detector_forward(x, y, params, batch_tile=TILE)
    out = jax.block_until_ready(out)

    ref = reference_forward(x, y, params)
    assert out.shape == (BATCH, OUTPUT_SIZE)
    assert jnp.allclose(jnp.sum(out, axis=1), 1.0, atol=1e-4)
    assert jnp.allclose(out, ref, atol=2e-3), float(jnp.max(jnp.abs(out - ref)))

    print("KERNEL_OK")
</pallas_src>

<mosaic_0001>
module attributes {stable_mosaic.version = 11 : i64} {
  func.func @_adjacency_kernel(%arg0: i32, %arg1: memref<128x128xbf16, #tpu.memory_space<vmem>>, %arg2: memref<128x128xbf16, #tpu.memory_space<vmem>>, %arg3: memref<256x128xbf16, #tpu.memory_space<vmem>>, %arg4: memref<1x128xf32, #tpu.memory_space<vmem>>, %arg5: memref<128x128xbf16, #tpu.memory_space<vmem>>, %arg6: memref<1x128xf32, #tpu.memory_space<vmem>>, %arg7: memref<128x2xbf16, #tpu.memory_space<vmem>>, %arg8: memref<1x2xf32, #tpu.memory_space<vmem>>, %arg9: memref<128x2xf32, #tpu.memory_space<vmem>>) attributes {dimension_semantics = [#tpu.dimension_semantics<parallel>], iteration_bounds = array<i64: 2>, scalar_prefetch = 0 : i64, scratch_operands = 0 : i64, tpu.core_type = #tpu.core_type<tc>, window_params = [{transform_indices = @transform_0, window_bounds = array<i64: 128, 128>}, {transform_indices = @transform_1, window_bounds = array<i64: 128, 128>}, {pipeline_mode = #tpu.pipeline_mode<synchronous>, transform_indices = @transform_2, window_bounds = array<i64: 256, 128>}, {pipeline_mode = #tpu.pipeline_mode<synchronous>, transform_indices = @transform_3, window_bounds = array<i64: 1, 128>}, {pipeline_mode = #tpu.pipeline_mode<synchronous>, transform_indices = @transform_4, window_bounds = array<i64: 128, 128>}, {pipeline_mode = #tpu.pipeline_mode<synchronous>, transform_indices = @transform_5, window_bounds = array<i64: 1, 128>}, {pipeline_mode = #tpu.pipeline_mode<synchronous>, transform_indices = @transform_6, window_bounds = array<i64: 128, 2>}, {pipeline_mode = #tpu.pipeline_mode<synchronous>, transform_indices = @transform_7, window_bounds = array<i64: 1, 2>}, {transform_indices = @transform_8, window_bounds = array<i64: 128, 2>}]} {
    %c0 = arith.constant 0 : index
    %c0_0 = arith.constant 0 : index
    %0 = vector.load %arg1[%c0, %c0_0] : memref<128x128xbf16, #tpu.memory_space<vmem>>, vector<128x128xbf16>
    %c0_1 = arith.constant 0 : index
    %c0_2 = arith.constant 0 : index
    %1 = vector.load %arg2[%c0_1, %c0_2] : memref<128x128xbf16, #tpu.memory_space<vmem>>, vector<128x128xbf16>
    %2 = tpu.concatenate %0, %1 in 1 : vector<128x128xbf16>, vector<128x128xbf16> -> vector<128x256xbf16>
    %c0_3 = arith.constant 0 : index
    %c0_4 = arith.constant 0 : index
    %3 = vector.load %arg3[%c0_3, %c0_4] : memref<256x128xbf16, #tpu.memory_space<vmem>>, vector<256x128xbf16>
    %cst = arith.constant dense<0.000000e+00> : vector<128x128xf32>
    %4 = tpu.matmul %2, %3, %cst {dimension_numbers = #tpu.dot_dimension_numbers<[1], [0], [0], [1], [0, 0, 1, 1], [], []>} : vector<128x256xbf16>, vector<256x128xbf16>, vector<128x128xf32> -> vector<128x128xf32>
    %c0_5 = arith.constant 0 : index
    %c0_6 = arith.constant 0 : index
    %5 = vector.load %arg4[%c0_5, %c0_6] : memref<1x128xf32, #tpu.memory_space<vmem>>, vector<1x128xf32>
    %6 = vector.broadcast %5 : vector<1x128xf32> to vector<128x128xf32>
    %7 = arith.addf %4, %6 : vector<128x128xf32>
    %cst_7 = arith.constant 0.000000e+00 : f32
    %8 = vector.broadcast %cst_7 : f32 to vector<128x128xf32>
    %9 = arith.maximumf %7, %8 : vector<128x128xf32>
    %10 = arith.truncf %9 : vector<128x128xf32> to vector<128x128xbf16>
    %c0_8 = arith.constant 0 : index
    %c0_9 = arith.constant 0 : index
    %11 = vector.load %arg5[%c0_8, %c0_9] : memref<128x128xbf16, #tpu.memory_space<vmem>>, vector<128x128xbf16>
    %cst_10 = arith.constant dense<0.000000e+00> : vector<128x128xf32>
    %12 = tpu.matmul %10, %11, %cst_10 {dimension_numbers = #tpu.dot_dimension_numbers<[1], [0], [0], [1], [0, 0, 1, 1], [], []>} : vector<128x128xbf16>, vector<128x128xbf16>, vector<128x128xf32> -> vector<128x128xf32>
    %c0_11 = arith.constant 0 : index
    %c0_12 = arith.constant 0 : index
    %13 = vector.load %arg6[%c0_11, %c0_12] : memref<1x128xf32, #tpu.memory_space<vmem>>, vector<1x128xf32>
    %14 = vector.broadcast %13 : vector<1x128xf32> to vector<128x128xf32>
    %15 = arith.addf %12, %14 : vector<128x128xf32>
    %cst_13 = arith.constant 0.000000e+00 : f32
    %16 = vector.broadcast %cst_13 : f32 to vector<128x128xf32>
    %17 = arith.maximumf %15, %16 : vector<128x128xf32>
    %18 = arith.addf %9, %17 : vector<128x128xf32>
    %19 = arith.truncf %18 : vector<128x128xf32> to vector<128x128xbf16>
    %c0_14 = arith.constant 0 : index
    %c0_15 = arith.constant 0 : index
    %20 = vector.load %arg7[%c0_14, %c0_15] : memref<128x2xbf16, #tpu.memory_space<vmem>>, vector<128x2xbf16>
    %cst_16 = arith.constant dense<0.000000e+00> : vector<128x2xf32>
    %21 = tpu.matmul %19, %20, %cst_16 {dimension_numbers = #tpu.dot_dimension_numbers<[1], [0], [0], [1], [0, 0, 1, 1], [], []>} : vector<128x128xbf16>, vector<128x2xbf16>, vector<128x2xf32> -> vector<128x2xf32>
    %c0_17 = arith.constant 0 : index
    %c0_18 = arith.constant 0 : index
    %22 = vector.load %arg8[%c0_17, %c0_18] : memref<1x2xf32, #tpu.memory_space<vmem>>, vector<1x2xf32>
    %23 = vector.broadcast %22 : vector<1x2xf32> to vector<128x2xf32>
    %24 = arith.addf %21, %23 : vector<128x2xf32>
    %cst_19 = arith.constant 0.000000e+00 : f32
    %25 = vector.broadcast %cst_19 : f32 to vector<128x2xf32>
    %26 = arith.subf %25, %24 : vector<128x2xf32>
    %27 = math.exp %26 : vector<128x2xf32>
    %cst_20 = arith.constant 1.000000e+00 : f32
    %28 = vector.broadcast %cst_20 : f32 to vector<128x2xf32>
    %29 = arith.addf %28, %27 : vector<128x2xf32>
    %cst_21 = arith.constant 1.000000e+00 : f32
    %30 = vector.broadcast %cst_21 : f32 to vector<128x2xf32>
    %31 = arith.divf %30, %29 : vector<128x2xf32>
    %c0_22 = arith.constant 0 : index
    %c0_23 = arith.constant 0 : index
    %32 = vector.load %arg9[%c0_22, %c0_23] : memref<128x2xf32, #tpu.memory_space<vmem>>, vector<128x2xf32>
    tpu.vector_store %arg9[%c0_22, %c0_23], %31 {strides = array<i32>} : memref<128x2xf32, #tpu.memory_space<vmem>>, vector<128x2xf32>,
    return
  }
  func.func @transform_0(%arg0: i32) -> (i32, i32) {
    %c0_i32 = arith.constant 0 : i32
    %c0_i32_0 = arith.constant 0 : i32
    return %arg0, %c0_i32 : i32, i32
  }
  func.func @transform_1(%arg0: i32) -> (i32, i32) {
    %c0_i32 = arith.constant 0 : i32
    %c0_i32_0 = arith.constant 0 : i32
    return %arg0, %c0_i32 : i32, i32
  }
  func.func @transform_2(%arg0: i32) -> (i32, i32) {
    %c0_i32 = arith.constant 0 : i32
    %c0_i32_0 = arith.constant 0 : i32
    %c0_i32_1 = arith.constant 0 : i32
    return %c0_i32, %c0_i32_0 : i32, i32
  }
  func.func @transform_3(%arg0: i32) -> (i32, i32) {
    %c0_i32 = arith.constant 0 : i32
    %c0_i32_0 = arith.constant 0 : i32
    %c0_i32_1 = arith.constant 0 : i32
    return %c0_i32, %c0_i32_0 : i32, i32
  }
  func.func @transform_4(%arg0: i32) -> (i32, i32) {
    %c0_i32 = arith.constant 0 : i32
    %c0_i32_0 = arith.constant 0 : i32
    %c0_i32_1 = arith.constant 0 : i32
    return %c0_i32, %c0_i32_0 : i32, i32
  }
  func.func @transform_5(%arg0: i32) -> (i32, i32) {
    %c0_i32 = arith.constant 0 : i32
    %c0_i32_0 = arith.constant 0 : i32
    %c0_i32_1 = arith.constant 0 : i32
    return %c0_i32, %c0_i32_0 : i32, i32
  }
  func.func @transform_6(%arg0: i32) -> (i32, i32) {
    %c0_i32 = arith.constant 0 : i32
    %c0_i32_0 = arith.constant 0 : i32
    %c0_i32_1 = arith.constant 0 : i32
    return %c0_i32, %c0_i32_0 : i32, i32
  }
  func.func @transform_7(%arg0: i32) -> (i32, i32) {
    %c0_i32 = arith.constant 0 : i32
    %c0_i32_0 = arith.constant 0 : i32
    %c0_i32_1 = arith.constant 0 : i32
    return %c0_i32, %c0_i32_0 : i32, i32
  }
  func.func @transform_8(%arg0: i32) -> (i32, i32) {
    %c0_i32 = arith.constant 0 : i32
    %c0_i32_0 = arith.constant 0 : i32
    return %arg0, %c0_i32 : i32, i32
  }
}

</mosaic_0001>

<llo_original>
// kernel: adjacency_detector_forward.1
$region0: #{adjacency_detector_forward.1}
  #allocation0 [shape = 'u32[]', space=smem, size = 0x4, offset = 0x4, fixed_abs, tag = 'smem constant byte address 0x4 - core index']
  #allocation1 [shape = 'u32[72,128]{1,0:T(1,128)}', space=vmem, size = 0x9000, scoped, tag = 'internal scratch']
  %s0 = inlined_call_operand.vmem [shape: bf16[256,128], index: 0, kind: input, shape index: {}]
  %s1 = inlined_call_operand.vmem [shape: bf16[256,128], index: 1, kind: input, shape index: {}]
  %s2 = inlined_call_operand.vmem [shape: bf16[256,128], index: 2, kind: input, shape index: {}]
  %s3 = inlined_call_operand.vmem [shape: f32[1,128], index: 3, kind: input, shape index: {}]
  %s4 = inlined_call_operand.vmem [shape: bf16[128,128], index: 4, kind: input, shape index: {}]
  %s5 = inlined_call_operand.vmem [shape: f32[1,128], index: 5, kind: input, shape index: {}]
  %s6 = inlined_call_operand.vmem [shape: bf16[128,2], index: 6, kind: input, shape index: {}]
  %s7 = inlined_call_operand.vmem [shape: f32[1,2], index: 7, kind: input, shape index: {}]
  %s8 = inlined_call_operand.vmem [shape: f32[256,2], index: 8, kind: output, shape index: {}]
  %s9 = sld [smem:[#allocation0]]
  $region65: #{adjacency_detector_forward.1} parent=0
    _
  %s11 = ssub.s32 1, %s9
  %s12 = scalar_select 0, %s11, %s9
  loop: start=0, step=1, limit=4
  $region2: #{adjacency_detector_forward.1} parent=0 // loop_pre_header
    _
  $region3: #{adjacency_detector_forward.1} parent=0 // loop_header
    %s14 = sphi 0, %s18
    %p15 = scmp.ge.s32.totalorder %s14, 4
    %s24 = sphi 0, %s26
    %s27 = sphi 0, %s24
    %s28 = sphi 0, %s27
    %s44 = sphi 0, %s28
    %s50 = sphi 0, %s52
    %s53 = sphi 0, %s50
    %s54 = sphi 0, %s53
    %s70 = sphi 0, %s54
    %s74 = sphi 0, %s74
    %s76 = sphi 0, %s74
    %s77 = sphi 0, %s76
    %s91 = sphi 0, %s77
    %s95 = sphi 0, %s95
    %s97 = sphi 0, %s95
    %s98 = sphi 0, %s97
    %s112 = sphi 0, %s98
    %s116 = sphi 0, %s116
    %s118 = sphi 0, %s116
    %s119 = sphi 0, %s118
    %s133 = sphi 0, %s119
    %s137 = sphi 0, %s137
    %s139 = sphi 0, %s137
    %s140 = sphi 0, %s139
    %s154 = sphi 0, %s140
    %s158 = sphi 0, %s158
    %s160 = sphi 0, %s158
    %s161 = sphi 0, %s160
    %s175 = sphi 0, %s161
    %s179 = sphi 0, %s179
    %s181 = sphi 0, %s179
    %s182 = sphi 0, %s181
    %s196 = sphi 0, %s182
    %s202 = sphi 0, %s204
    %s205 = sphi 0, %s202
    %s206 = sphi 0, %s205
    %s222 = sphi 0, %s206
  $region4: #{adjacency_detector_forward.1} parent=0 // loop_header_branch
    %17 = sbr.rel (%p15) target = $region8
  $region5: #{adjacency_detector_forward.1} parent=0 // loop_body
    %s19 = ssub.s32 %s14, 1
    %s20 = ssub.s32 %s14, 2
    %s21 = sadd.s32 %s14, 1
    %s22 = ssub.s32 %s14, %s21
    %p23 = scmp.eq.s32.totalorder %s22, 0
    %s25 = sadd.s32 %s24, 1
    %s26 = scalar_select %p23, %s24, %s25
    %p29 = pneg %p23
    %p30 = scmp.eq.s32.totalorder %s14, 1
    %p31 = por %p29, %p30
    %p32 = scmp.ne.s32.totalorder %s24, %s27
    %p33 = scmp.eq.s32.totalorder %s14, 0
    %p34 = por %p32, %p33
    %p35 = scmp.ne.s32.totalorder %s24, %s27
    %p36 = scmp.eq.s32.totalorder %s19, 1
    %p37 = por %p35, %p36
    %p38 = scmp.ne.s32.totalorder %s27, %s28
    %p39 = scmp.eq.s32.totalorder %s19, 0
    %p40 = por %p38, %p39
    %p41 = scmp.ne.s32.totalorder %s27, %s28
    %p42 = scmp.eq.s32.totalorder %s20, 1
    %p43 = por %p41, %p42
    %p45 = scmp.ne.s32.totalorder %s28, %s44
    %p46 = scmp.eq.s32.totalorder %s20, 0
    %p47 = por %p45, %p46
    %s48 = ssub.s32 %s14, %s21
    %p49 = scmp.eq.s32.totalorder %s48, 0
    %s51 = sadd.s32 %s50, 1
    %s52 = scalar_select %p49, %s50, %s51
    %p55 = pneg %p49
    %p56 = scmp.eq.s32.totalorder %s14, 1
    %p57 = por %p55, %p56
    %p58 = scmp.ne.s32.totalorder %s50, %s53
    %p59 = scmp.eq.s32.totalorder %s14, 0
    %p60 = por %p58, %p59
    %p61 = scmp.ne.s32.totalorder %s50, %s53
    %p62 = scmp.eq.s32.totalorder %s19, 1
    %p63 = por %p61, %p62
    %p64 = scmp.ne.s32.totalorder %s53, %s54
    %p65 = scmp.eq.s32.totalorder %s19, 0
    %p66 = por %p64, %p65
    %p67 = scmp.ne.s32.totalorder %s53, %s54
    %p68 = scmp.eq.s32.totalorder %s20, 1
    %p69 = por %p67, %p68
    %p71 = scmp.ne.s32.totalorder %s54, %s70
    %p72 = scmp.eq.s32.totalorder %s20, 0
    %p73 = por %p71, %p72
    %s75 = sadd.s32 %s74, 1
    %p78 = scmp.eq.s32.totalorder %s14, 1
    %p79 = scmp.ne.s32.totalorder %s74, %s76
    %p80 = scmp.eq.s32.totalorder %s14, 0
    %p81 = por %p79, %p80
    %p82 = scmp.ne.s32.totalorder %s74, %s76
    %p83 = scmp.eq.s32.totalorder %s19, 1
    %p84 = por %p82, %p83
    %p85 = scmp.ne.s32.totalorder %s76, %s77
    %p86 = scmp.eq.s32.totalorder %s19, 0
    %p87 = por %p85, %p86
    %p88 = scmp.ne.s32.totalorder %s76, %s77
    %p89 = scmp.eq.s32.totalorder %s20, 1
    %p90 = por %p88, %p89
    %p92 = scmp.ne.s32.totalorder %s77, %s91
    %p93 = scmp.eq.s32.totalorder %s20, 0
    %p94 = por %p92, %p93
    %s96 = sadd.s32 %s95, 1
    %p99 = scmp.eq.s32.totalorder %s14, 1
    %p100 = scmp.ne.s32.totalorder %s95, %s97
    %p101 = scmp.eq.s32.totalorder %s14, 0
    %p102 = por %p100, %p101
    %p103 = scmp.ne.s32.totalorder %s95, %s97
    %p104 = scmp.eq.s32.totalorder %s19, 1
    %p105 = por %p103, %p104
    %p106 = scmp.ne.s32.totalorder %s97, %s98
    %p107 = scmp.eq.s32.totalorder %s19, 0
    %p108 = por %p106, %p107
    %p109 = scmp.ne.s32.totalorder %s97, %s98
    %p110 = scmp.eq.s32.totalorder %s20, 1
    %p111 = por %p109, %p110
    %p113 = scmp.ne.s32.totalorder %s98, %s112
    %p114 = scmp.eq.s32.totalorder %s20, 0
    %p115 = por %p113, %p114
    %s117 = sadd.s32 %s116, 1
    %p120 = scmp.eq.s32.totalorder %s14, 1
    %p121 = scmp.ne.s32.totalorder %s116, %s118
    %p122 = scmp.eq.s32.totalorder %s14, 0
    %p123 = por %p121, %p122
    %p124 = scmp.ne.s32.totalorder %s116, %s118
    %p125 = scmp.eq.s32.totalorder %s19, 1
    %p126 = por %p124, %p125
    %p127 = scmp.ne.s32.totalorder %s118, %s119
    %p128 = scmp.eq.s32.totalorder %s19, 0
    %p129 = por %p127, %p128
    %p130 = scmp.ne.s32.totalorder %s118, %s119
    %p131 = scmp.eq.s32.totalorder %s20, 1
    %p132 = por %p130, %p131
    %p134 = scmp.ne.s32.totalorder %s119, %s133
    %p135 = scmp.eq.s32.totalorder %s20, 0
    %p136 = por %p134, %p135
    %s138 = sadd.s32 %s137, 1
    %p141 = scmp.eq.s32.totalorder %s14, 1
    %p142 = scmp.ne.s32.totalorder %s137, %s139
    %p143 = scmp.eq.s32.totalorder %s14, 0
    %p144 = por %p142, %p143
    %p145 = scmp.ne.s32.totalorder %s137, %s139
    %p146 = scmp.eq.s32.totalorder %s19, 1
    %p147 = por %p145, %p146
    %p148 = scmp.ne.s32.totalorder %s139, %s140
    %p149 = scmp.eq.s32.totalorder %s19, 0
    %p150 = por %p148, %p149
    %p151 = scmp.ne.s32.totalorder %s139, %s140
    %p152 = scmp.eq.s32.totalorder %s20, 1
    %p153 = por %p151, %p152
    %p155 = scmp.ne.s32.totalorder %s140, %s154
    %p156 = scmp.eq.s32.totalorder %s20, 0
    %p157 = por %p155, %p156
    %s159 = sadd.s32 %s158, 1
    %p162 = scmp.eq.s32.totalorder %s14, 1
    %p163 = scmp.ne.s32.totalorder %s158, %s160
    %p164 = scmp.eq.s32.totalorder %s14, 0
    %p165 = por %p163, %p164
    %p166 = scmp.ne.s32.totalorder %s158, %s160
    %p167 = scmp.eq.s32.totalorder %s19, 1
    %p168 = por %p166, %p167
    %p169 = scmp.ne.s32.totalorder %s160, %s161
    %p170 = scmp.eq.s32.totalorder %s19, 0
    %p171 = por %p169, %p170
    %p172 = scmp.ne.s32.totalorder %s160, %s161
    %p173 = scmp.eq.s32.totalorder %s20, 1
    %p174 = por %p172, %p173
    %p176 = scmp.ne.s32.totalorder %s161, %s175
    %p177 = scmp.eq.s32.totalorder %s20, 0
    %p178 = por %p176, %p177
    %s180 = sadd.s32 %s179, 1
    %p183 = scmp.eq.s32.totalorder %s14, 1
    %p184 = scmp.ne.s32.totalorder %s179, %s181
    %p185 = scmp.eq.s32.totalorder %s14, 0
    %p186 = por %p184, %p185
    %p187 = scmp.ne.s32.totalorder %s179, %s181
    %p188 = scmp.eq.s32.totalorder %s19, 1
    %p189 = por %p187, %p188
    %p190 = scmp.ne.s32.totalorder %s181, %s182
    %p191 = scmp.eq.s32.totalorder %s19, 0
    %p192 = por %p190, %p191
    %p193 = scmp.ne.s32.totalorder %s181, %s182
    %p194 = scmp.eq.s32.totalorder %s20, 1
    %p195 = por %p193, %p194
    %p197 = scmp.ne.s32.totalorder %s182, %s196
    %p198 = scmp.eq.s32.totalorder %s20, 0
    %p199 = por %p197, %p198
    %s200 = ssub.s32 %s14, %s21
    %p201 = scmp.eq.s32.totalorder %s200, 0
    %s203 = sadd.s32 %s202, 1
    %s204 = scalar_select %p201, %s202, %s203
    %p207 = pneg %p201
    %p208 = scmp.eq.s32.totalorder %s14, 1
    %p209 = por %p207, %p208
    %p210 = scmp.ne.s32.totalorder %s202, %s205
    %p211 = scmp.eq.s32.totalorder %s14, 0
    %p212 = por %p210, %p211
    %p213 = scmp.ne.s32.totalorder %s202, %s205
    %p214 = scmp.eq.s32.totalorder %s19, 1
    %p215 = por %p213, %p214
    %p216 = scmp.ne.s32.totalorder %s205, %s206
    %p217 = scmp.eq.s32.totalorder %s19, 0
    %p218 = por %p216, %p217
    %p219 = scmp.ne.s32.totalorder %s205, %s206
    %p220 = scmp.eq.s32.totalorder %s20, 1
    %p221 = por %p219, %p220
    %p223 = scmp.ne.s32.totalorder %s206, %s222
    %p224 = scmp.eq.s32.totalorder %s20, 0
    %p225 = por %p223, %p224
    %p226 = scmp.le.s32.totalorder 1, %s14
    %p227 = scmp.lt.s32.totalorder %s14, 3
    %p228 = pnand %p226, %p227
    %p229 = pneg %p228
    // Predicated region
    $region9: #{adjacency_detector_forward.1} parent=5 // pred_check
      _
    $region10: #{adjacency_detector_forward.1} parent=5 // pred_check_branch
      %231 = sbr.rel (%p228) target = $region12
    $region11: #{adjacency_detector_forward.1} parent=5 // pred_region
      %s232 = ssub.s32 %s14, 1
      // Predicated region
      $region13: #{adjacency_detector_forward.1} parent=11 // pred_check
        %p233 = pneg %p87
      $region14: #{adjacency_detector_forward.1} parent=11 // pred_check_branch
        %235 = sbr.rel (%p233) target = $region16
      $region15: #{adjacency_detector_forward.1} parent=11 // pred_region
        _
      $region16: #{adjacency_detector_forward.1} parent=11 // pred_fallthru
        _
      // Predicated region
      $region17: #{adjacency_detector_forward.1} parent=11 // pred_check
        %p236 = pneg %p108
      $region18: #{adjacency_detector_forward.1} parent=11 // pred_check_branch
        %238 = sbr.rel (%p236) target = $region20
      $region19: #{adjacency_detector_forward.1} parent=11 // pred_region
        _
      $region20: #{adjacency_detector_forward.1} parent=11 // pred_fallthru
        _
      // Predicated region
      $region21: #{adjacency_detector_forward.1} parent=11 // pred_check
        %p239 = pneg %p129
      $region22: #{adjacency_detector_forward.1} parent=11 // pred_check_branch
        %241 = sbr.rel (%p239) target = $region24
      $region23: #{adjacency_detector_forward.1} parent=11 // pred_region
        _
      $region24: #{adjacency_detector_forward.1} parent=11 // pred_fallthru
        _
      // Predicated region
      $region25: #{adjacency_detector_forward.1} parent=11 // pred_check
        %p242 = pneg %p150
      $region26: #{adjacency_detector_forward.1} parent=11 // pred_check_branch
        %244 = sbr.rel (%p242) target = $region28
      $region27: #{adjacency_detector_forward.1} parent=11 // pred_region
        _
      $region28: #{adjacency_detector_forward.1} parent=11 // pred_fallthru
        _
      // Predicated region
      $region29: #{adjacency_detector_forward.1} parent=11 // pred_check
        %p245 = pneg %p171
      $region30: #{adjacency_detector_forward.1} parent=11 // pred_check_branch
        %247 = sbr.rel (%p245) target = $region32
      $region31: #{adjacency_detector_forward.1} parent=11 // pred_region
        _
      $region32: #{adjacency_detector_forward.1} parent=11 // pred_fallthru
        _
      // Predicated region
      $region33: #{adjacency_detector_forward.1} parent=11 // pred_check
        %p248 = pneg %p192
      $region34: #{adjacency_detector_forward.1} parent=11 // pred_check_branch
        %250 = sbr.rel (%p248) target = $region36
      $region35: #{adjacency_detector_forward.1} parent=11 // pred_region
        _
      $region36: #{adjacency_detector_forward.1} parent=11 // pred_fallthru
        _
    $region12: #{adjacency_detector_forward.1} parent=5 // pred_fallthru
      _
    %p251 = scmp.lt.s32.totalorder %s14, 2
    // Predicated region
    $region37: #{adjacency_detector_forward.1} parent=5 // pred_check
      %p252 = pneg %p251
    $region38: #{adjacency_detector_forward.1} parent=5 // pred_check_branch
      %254 = sbr.rel (%p252) target = $region40
    $region39: #{adjacency_detector_forward.1} parent=5 // pred_region
      // Predicated region
      $region41: #{adjacency_detector_forward.1} parent=39 // pred_check
        %p255 = pneg %p34
      $region42: #{adjacency_detector_forward.1} parent=39 // pred_check_branch
        %257 = sbr.rel (%p255) target = $region44
      $region43: #{adjacency_detector_forward.1} parent=39 // pred_region
        %s258 = smul.u32 16, %s14
        %p259 = scmp.lt.s32.totalorder %s258, 31
        %s260 = scalar_select %p259, %s258, 31
        %s261 = smul.addr %s260, 4
        %s262 = scalar_lea.vmem %s0, %s261
        %s263 = smul.u32 16, %s14
      $region44: #{adjacency_detector_forward.1} parent=39 // pred_fallthru
        _
      // Predicated region
      $region45: #{adjacency_detector_forward.1} parent=39 // pred_check
        %p264 = pneg %p60
      $region46: #{adjacency_detector_forward.1} parent=39 // pred_check_branch
        %266 = sbr.rel (%p264) target = $region48
      $region47: #{adjacency_detector_forward.1} parent=39 // pred_region
        %s267 = smul.u32 16, %s14
        %p268 = scmp.lt.s32.totalorder %s267, 31
        %s269 = scalar_select %p268, %s267, 31
        %s270 = smul.addr %s269, 4
        %s271 = scalar_lea.vmem %s1, %s270
        %s272 = smul.u32 16, %s14
      $region48: #{adjacency_detector_forward.1} parent=39 // pred_fallthru
        _
    $region40: #{adjacency_detector_forward.1} parent=5 // pred_fallthru
      _
    %p273 = scmp.le.s32.totalorder 1, %s14
    %p274 = scmp.lt.s32.totalorder %s14, 3
    %p275 = pnand %p273, %p274
    %p276 = pneg %p275
    // Predicated region
    $region49: #{adjacency_detector_forward.1} parent=5 // pred_check
      _
    $region50: #{adjacency_detector_forward.1} parent=5 // pred_check_branch
      %278 = sbr.rel (%p275) target = $region52
    $region51: #{adjacency_detector_forward.1} parent=5 // pred_region
      %s279 = ssub.s32 %s14, 1
      %s280 = smul.u32 16, %s19
      %p281 = scmp.lt.s32.totalorder %s280, 31
      %s282 = scalar_select %p281, %s280, 31
      %s283 = smul.addr %s282, 4
      %s284 = scalar_lea.vmem %s0, %s283
      %p285 = pneg %p40
      %p286 = pneg %p37
      %s287 = smul.u32 16, %s19
      %p288 = scmp.lt.s32.totalorder %s287, 31
      %s289 = scalar_select %p288, %s287, 31
      %s290 = smul.addr %s289, 4
      %s291 = scalar_lea.vmem %s1, %s290
      %p292 = pneg %p66
      %p293 = pneg %p63
      %p294 = pneg %p87
      %p295 = pneg %p84
      %p296 = pneg %p108
      %p297 = pneg %p105
      %p298 = pneg %p129
      %p299 = pneg %p126
      %p300 = pneg %p150
      %p301 = pneg %p147
      %p302 = pneg %p171
      %p303 = pneg %p168
      %p304 = pneg %p192
      %p305 = pneg %p189
      %p306 = pneg %p218
      %p307 = pneg %p215
      %s308 = smul.u32 16, %s19
      %p309 = scmp.lt.s32.totalorder %s308, 31
      %s310 = scalar_select %p309, %s308, 31
      %s311 = smul.addr %s310, 8
      %s312 = scalar_lea.vmem %s8, %s311
      %s313 = smul.u32 16, %s19
      %p314 = scmp.lt.s32.totalorder %s313, 31
      %s315 = scalar_select %p314, %s313, 31
      %s316 = smul.addr %s315, 4
      %s317 = scalar_lea.vmem %s0, %s316
      %s318 = smul.u32 16, %s19
      %s319 = smul.u32 16, %s19
      %p320 = scmp.lt.s32.totalorder %s319, 31
      %s321 = scalar_select %p320, %s319, 31
      %s322 = smul.addr %s321, 4
      %s323 = scalar_lea.vmem %s1, %s322
      %s324 = smul.u32 16, %s19
      %s325 = smul.u32 16, %s19
      %p326 = scmp.lt.s32.totalorder %s325, 31
      %s327 = scalar_select %p326, %s325, 31
      %s328 = smul.addr %s327, 8
      %s329 = scalar_lea.vmem %s8, %s328
      %s330 = smul.u32 16, %s19
      %v331 = vld [vmem:[%s317] sm:$0xf]
      %v332 = vld [vmem:[%s317 + $0x4] sm:$0xf]
      %v333 = vld [vmem:[%s317 + $0x8] sm:$0xf]
      %v334 = vld [vmem:[%s317 + $0xc] sm:$0xf]
      %v335 = vld [vmem:[%s317 + $0x10] sm:$0xf]
      %v336 = vld [vmem:[%s317 + $0x14] sm:$0xf]
      %v337 = vld [vmem:[%s317 + $0x18] sm:$0xf]
      %v338 = vld [vmem:[%s317 + $0x1c] sm:$0xf]
      %v339 = vld [vmem:[%s317 + $0x20] sm:$0xf]
      %v340 = vld [vmem:[%s317 + $0x24] sm:$0xf]
      %v341 = vld [vmem:[%s317 + $0x28] sm:$0xf]
      %v342 = vld [vmem:[%s317 + $0x2c] sm:$0xf]
      %v343 = vld [vmem:[%s317 + $0x30] sm:$0xf]
      %v344 = vld [vmem:[%s317 + $0x34] sm:$0xf]
      %v345 = vld [vmem:[%s317 + $0x38] sm:$0xf]
      %v346 = vld [vmem:[%s317 + $0x3c] sm:$0xf]
      %v347 = vld [vmem:[%s323] sm:$0xf]
      %v348 = vld [vmem:[%s323 + $0x4] sm:$0xf]
      %v349 = vld [vmem:[%s323 + $0x8] sm:$0xf]
      %v350 = vld [vmem:[%s323 + $0xc] sm:$0xf]
      %v351 = vld [vmem:[%s323 + $0x10] sm:$0xf]
      %v352 = vld [vmem:[%s323 + $0x14] sm:$0xf]
      %v353 = vld [vmem:[%s323 + $0x18] sm:$0xf]
      %v354 = vld [vmem:[%s323 + $0x1c] sm:$0xf]
      %v355 = vld [vmem:[%s323 + $0x20] sm:$0xf]
      %v356 = vld [vmem:[%s323 + $0x24] sm:$0xf]
      %v357 = vld [vmem:[%s323 + $0x28] sm:$0xf]
      %v358 = vld [vmem:[%s323 + $0x2c] sm:$0xf]
      %v359 = vld [vmem:[%s323 + $0x30] sm:$0xf]
      %v360 = vld [vmem:[%s323 + $0x34] sm:$0xf]
      %v361 = vld [vmem:[%s323 + $0x38] sm:$0xf]
      %v362 = vld [vmem:[%s323 + $0x3c] sm:$0xf]
      %v379 = vunpack.c.l.b16 %v331
      %v380 = vunpack.c.l.b16 %v332
      %v381 = vunpack.c.l.b16 %v333
      %v382 = vunpack.c.l.b16 %v334
      %v383 = vunpack.c.l.b16 %v335
      %v384 = vunpack.c.l.b16 %v336
      %v385 = vunpack.c.l.b16 %v337
      %v386 = vunpack.c.l.b16 %v338
      %v387 = vunpack.c.l.b16 %v339
      %v388 = vunpack.c.l.b16 %v340
      %v389 = vunpack.c.l.b16 %v341
      %v390 = vunpack.c.l.b16 %v342
      %v391 = vunpack.c.l.b16 %v343
      %v392 = vunpack.c.l.b16 %v344
      %v393 = vunpack.c.l.b16 %v345
      %v394 = vunpack.c.l.b16 %v346
      %v395 = vpack.c.b16 %v380, %v379
      %v396 = vpack.c.b16 %v382, %v381
      %v397 = vpack.c.b16 %v384, %v383
      %v398 = vpack.c.b16 %v386, %v385
      %v399 = vpack.c.b16 %v388, %v387
      %v400 = vpack.c.b16 %v390, %v389
      %v401 = vpack.c.b16 %v392, %v391
      %v402 = vpack.c.b16 %v394, %v393
      %v427 = vunpack.c.l.b16 %v347
      %v428 = vunpack.c.l.b16 %v348
      %v429 = vunpack.c.l.b16 %v349
      %v430 = vunpack.c.l.b16 %v350
      %v431 = vunpack.c.l.b16 %v351
      %v432 = vunpack.c.l.b16 %v352
      %v433 = vunpack.c.l.b16 %v353
      %v434 = vunpack.c.l.b16 %v354
      %v435 = vunpack.c.l.b16 %v355
      %v436 = vunpack.c.l.b16 %v356
      %v437 = vunpack.c.l.b16 %v357
      %v438 = vunpack.c.l.b16 %v358
      %v439 = vunpack.c.l.b16 %v359
      %v440 = vunpack.c.l.b16 %v360
      %v441 = vunpack.c.l.b16 %v361
      %v442 = vunpack.c.l.b16 %v362
      %v443 = vpack.c.b16 %v428, %v427
      %v444 = vpack.c.b16 %v430, %v429
      %v445 = vpack.c.b16 %v432, %v431
      %v446 = vpack.c.b16 %v434, %v433
      %v447 = vpack.c.b16 %v436, %v435
      %v448 = vpack.c.b16 %v438, %v437
      %v449 = vpack.c.b16 %v440, %v439
      %v450 = vpack.c.b16 %v442, %v441
      %v459 = vld [vmem:[%s2] sm:$0xf]
      %v460 = vld [vmem:[%s2 + $0x4] sm:$0xf]
      %v461 = vld [vmem:[%s2 + $0x8] sm:$0xf]
      %v462 = vld [vmem:[%s2 + $0xc] sm:$0xf]
      %v463 = vld [vmem:[%s2 + $0x10] sm:$0xf]
      %v464 = vld [vmem:[%s2 + $0x14] sm:$0xf]
      %v465 = vld [vmem:[%s2 + $0x18] sm:$0xf]
      %v466 = vld [vmem:[%s2 + $0x1c] sm:$0xf]
      %v467 = vld [vmem:[%s2 + $0x20] sm:$0xf]
      %v468 = vld [vmem:[%s2 + $0x24] sm:$0xf]
      %v469 = vld [vmem:[%s2 + $0x28] sm:$0xf]
      %v470 = vld [vmem:[%s2 + $0x2c] sm:$0xf]
      %v471 = vld [vmem:[%s2 + $0x30] sm:$0xf]
      %v472 = vld [vmem:[%s2 + $0x34] sm:$0xf]
      %v473 = vld [vmem:[%s2 + $0x38] sm:$0xf]
      %v474 = vld [vmem:[%s2 + $0x3c] sm:$0xf]
      %v475 = vld [vmem:[%s2 + $0x40] sm:$0xf]
      %v476 = vld [vmem:[%s2 + $0x44] sm:$0xf]
      %v477 = vld [vmem:[%s2 + $0x48] sm:$0xf]
      %v478 = vld [vmem:[%s2 + $0x4c] sm:$0xf]
      %v479 = vld [vmem:[%s2 + $0x50] sm:$0xf]
      %v480 = vld [vmem:[%s2 + $0x54] sm:$0xf]
      %v481 = vld [vmem:[%s2 + $0x58] sm:$0xf]
      %v482 = vld [vmem:[%s2 + $0x5c] sm:$0xf]
      %v483 = vld [vmem:[%s2 + $0x60] sm:$0xf]
      %v484 = vld [vmem:[%s2 + $0x64] sm:$0xf]
      %v485 = vld [vmem:[%s2 + $0x68] sm:$0xf]
      %v486 = vld [vmem:[%s2 + $0x6c] sm:$0xf]
      %v487 = vld [vmem:[%s2 + $0x70] sm:$0xf]
      %v488 = vld [vmem:[%s2 + $0x74] sm:$0xf]
      %v489 = vld [vmem:[%s2 + $0x78] sm:$0xf]
      %v490 = vld [vmem:[%s2 + $0x7c] sm:$0xf]
      %v491 = vld [vmem:[%s3] sm:$0x1]
      %v493 = vperm.slane %v491, 0
      %v527 = vunpack.c.l.b16 %v459
      %v528 = vunpack.c.l.b16 %v460
      %v529 = vunpack.c.l.b16 %v461
      %v530 = vunpack.c.l.b16 %v462
      %v531 = vunpack.c.l.b16 %v463
      %v532 = vunpack.c.l.b16 %v464
      %v533 = vunpack.c.l.b16 %v465
      %v534 = vunpack.c.l.b16 %v466
      %v535 = vunpack.c.l.b16 %v467
      %v536 = vunpack.c.l.b16 %v468
      %v537 = vunpack.c.l.b16 %v469
      %v538 = vunpack.c.l.b16 %v470
      %v539 = vunpack.c.l.b16 %v471
      %v540 = vunpack.c.l.b16 %v472
      %v541 = vunpack.c.l.b16 %v473
      %v542 = vunpack.c.l.b16 %v474
      %v543 = vunpack.c.l.b16 %v475
      %v544 = vunpack.c.l.b16 %v476
      %v545 = vunpack.c.l.b16 %v477
      %v546 = vunpack.c.l.b16 %v478
      %v547 = vunpack.c.l.b16 %v479
      %v548 = vunpack.c.l.b16 %v480
      %v549 = vunpack.c.l.b16 %v481
      %v550 = vunpack.c.l.b16 %v482
      %v551 = vunpack.c.l.b16 %v483
      %v552 = vunpack.c.l.b16 %v484
      %v553 = vunpack.c.l.b16 %v485
      %v554 = vunpack.c.l.b16 %v486
      %v555 = vunpack.c.l.b16 %v487
      %v556 = vunpack.c.l.b16 %v488
      %v557 = vunpack.c.l.b16 %v489
      %v558 = vunpack.c.l.b16 %v490
      %v559 = vpack.c.b16 %v528, %v527
      %v560 = vpack.c.b16 %v530, %v529
      %v561 = vpack.c.b16 %v532, %v531
      %v562 = vpack.c.b16 %v534, %v533
      %v563 = vpack.c.b16 %v536, %v535
      %v564 = vpack.c.b16 %v538, %v537
      %v565 = vpack.c.b16 %v540, %v539
      %v566 = vpack.c.b16 %v542, %v541
      %v567 = vpack.c.b16 %v544, %v543
      %v568 = vpack.c.b16 %v546, %v545
      %v569 = vpack.c.b16 %v548, %v547
      %v570 = vpack.c.b16 %v550, %v549
      %v571 = vpack.c.b16 %v552, %v551
      %v572 = vpack.c.b16 %v554, %v553
      %v573 = vpack.c.b16 %v556, %v555
      %v574 = vpack.c.b16 %v558, %v557
      %591 = vmatpush.bf16.msra.mxu0 %v566
      %592 = vmatpush.bf16.msra.mxu0 %v565
      %593 = vmatpush.bf16.msra.mxu0 %v564
      %594 = vmatpush.bf16.msra.mxu0 %v563
      %595 = vmatpush.bf16.msra.mxu0 %v562
      %596 = vmatpush.bf16.msra.mxu0 %v561
      %597 = vmatpush.bf16.msra.mxu0 %v560
      %598 = vmatpush.bf16.msra.mxu0 %v559
      %599 = vmatmul.bf16.gmra.mxu0 %v395
      %v600 = vpop.f32.mrf.mxu0
      %v601 = vadd.f32 %v493, %v600
      %v602 = vpop.f32.mrf.mxu0
      %v603 = vadd.f32 %v493, %v602
      %604 = vmatmul.bf16.gmra.mxu0 %v396
      %v605 = vpop.f32.mrf.mxu0
      %v606 = vadd.f32 %v493, %v605
      %v607 = vpop.f32.mrf.mxu0
      %v608 = vadd.f32 %v493, %v607
      %609 = vmatmul.bf16.gmra.mxu0 %v397
      %v610 = vpop.f32.mrf.mxu0
      %v611 = vadd.f32 %v493, %v610
      %v612 = vpop.f32.mrf.mxu0
      %v613 = vadd.f32 %v493, %v612
      %614 = vmatmul.bf16.gmra.mxu0 %v398
      %v615 = vpop.f32.mrf.mxu0
      %v616 = vadd.f32 %v493, %v615
      %v617 = vpop.f32.mrf.mxu0
      %v618 = vadd.f32 %v493, %v617
      %619 = vmatmul.bf16.gmra.mxu0 %v399
      %v620 = vpop.f32.mrf.mxu0
      %v621 = vadd.f32 %v493, %v620
      %v622 = vpop.f32.mrf.mxu0
      %v623 = vadd.f32 %v493, %v622
      %624 = vmatmul.bf16.gmra.mxu0 %v400
      %v625 = vpop.f32.mrf.mxu0
      %v626 = vadd.f32 %v493, %v625
      %v627 = vpop.f32.mrf.mxu0
      %v628 = vadd.f32 %v493, %v627
      %629 = vmatmul.bf16.gmra.mxu0 %v401
      %v630 = vpop.f32.mrf.mxu0
      %v631 = vadd.f32 %v493, %v630
      %v632 = vpop.f32.mrf.mxu0
      %v633 = vadd.f32 %v493, %v632
      %634 = vmatmul.bf16.gmra.mxu0 %v402
      %v635 = vpop.f32.mrf.mxu0
      %v636 = vadd.f32 %v493, %v635
      %v637 = vpop.f32.mrf.mxu0
      %v638 = vadd.f32 %v493, %v637
      %639 = vdwg.mxu0
      %640 = vmatpush.bf16.msra.mxu0 %v574
      %641 = vmatpush.bf16.msra.mxu0 %v573
      %642 = vmatpush.bf16.msra.mxu0 %v572
      %643 = vmatpush.bf16.msra.mxu0 %v571
      %644 = vmatpush.bf16.msra.mxu0 %v570
      %645 = vmatpush.bf16.msra.mxu0 %v569
      %646 = vmatpush.bf16.msra.mxu0 %v568
      %647 = vmatpush.bf16.msra.mxu0 %v567
      %648 = vmatmul.bf16.gmra.mxu0 %v443
      %v649 = vpop.f32.mrf.mxu0
      %v650 = vadd.f32 %v601, %v649
      %v651 = vpop.f32.mrf.mxu0
      %v652 = vadd.f32 %v603, %v651
      %653 = vmatmul.bf16.gmra.mxu0 %v444
      %v654 = vpop.f32.mrf.mxu0
      %v655 = vadd.f32 %v606, %v654
      %v656 = vpop.f32.mrf.mxu0
      %v657 = vadd.f32 %v608, %v656
      %658 = vmatmul.bf16.gmra.mxu0 %v445
      %v659 = vpop.f32.mrf.mxu0
      %v660 = vadd.f32 %v611, %v659
      %v661 = vpop.f32.mrf.mxu0
      %v662 = vadd.f32 %v613, %v661
      %663 = vmatmul.bf16.gmra.mxu0 %v446
      %v664 = vpop.f32.mrf.mxu0
      %v665 = vadd.f32 %v616, %v664
      %v666 = vpop.f32.mrf.mxu0
      %v667 = vadd.f32 %v618, %v666
      %668 = vmatmul.bf16.gmra.mxu0 %v447
      %v669 = vpop.f32.mrf.mxu0
      %v670 = vadd.f32 %v621, %v669
      %v671 = vpop.f32.mrf.mxu0
      %v672 = vadd.f32 %v623, %v671
      %673 = vmatmul.bf16.gmra.mxu0 %v448
      %v674 = vpop.f32.mrf.mxu0
      %v675 = vadd.f32 %v626, %v674
      %v676 = vpop.f32.mrf.mxu0
      %v677 = vadd.f32 %v628, %v676
      %678 = vmatmul.bf16.gmra.mxu0 %v449
      %v679 = vpop.f32.mrf.mxu0
      %v680 = vadd.f32 %v631, %v679
      %v681 = vpop.f32.mrf.mxu0
      %v682 = vadd.f32 %v633, %v681
      %683 = vmatmul.bf16.gmra.mxu0 %v450
      %v684 = vpop.f32.mrf.mxu0
      %v685 = vadd.f32 %v636, %v684
      %v686 = vpop.f32.mrf.mxu0
      %v687 = vadd.f32 %v638, %v686
      %688 = vdwg.mxu0
      %v689 = vmax.f32 %v650, 0.0
      %v690 = vmax.f32 %v652, 0.0
      %v691 = vmax.f32 %v655, 0.0
      %v692 = vmax.f32 %v657, 0.0
      %v693 = vmax.f32 %v660, 0.0
      %v694 = vmax.f32 %v662, 0.0
      %v695 = vmax.f32 %v665, 0.0
      %v696 = vmax.f32 %v667, 0.0
      %v697 = vmax.f32 %v670, 0.0
      %v698 = vmax.f32 %v672, 0.0
      %v699 = vmax.f32 %v675, 0.0
      %v700 = vmax.f32 %v677, 0.0
      %v701 = vmax.f32 %v680, 0.0
      %v702 = vmax.f32 %v682, 0.0
      %v703 = vmax.f32 %v685, 0.0
      %v704 = vmax.f32 %v687, 0.0
      %v705 = vpack.c.bf16 %v690, %v689
      %v706 = vpack.c.bf16 %v692, %v691
      %v707 = vpack.c.bf16 %v694, %v693
      %v708 = vpack.c.bf16 %v696, %v695
      %v709 = vpack.c.bf16 %v698, %v697
      %v710 = vpack.c.bf16 %v700, %v699
      %v711 = vpack.c.bf16 %v702, %v701
      %v712 = vpack.c.bf16 %v704, %v703
      %v713 = vld [vmem:[%s4] sm:$0xf]
      %v714 = vld [vmem:[%s4 + $0x4] sm:$0xf]
      %v715 = vld [vmem:[%s4 + $0x8] sm:$0xf]
      %v716 = vld [vmem:[%s4 + $0xc] sm:$0xf]
      %v717 = vld [vmem:[%s4 + $0x10] sm:$0xf]
      %v718 = vld [vmem:[%s4 + $0x14] sm:$0xf]
      %v719 = vld [vmem:[%s4 + $0x18] sm:$0xf]
      %v720 = vld [vmem:[%s4 + $0x1c] sm:$0xf]
      %v721 = vld [vmem:[%s4 + $0x20] sm:$0xf]
      %v722 = vld [vmem:[%s4 + $0x24] sm:$0xf]
      %v723 = vld [vmem:[%s4 + $0x28] sm:$0xf]
      %v724 = vld [vmem:[%s4 + $0x2c] sm:$0xf]
      %v725 = vld [vmem:[%s4 + $0x30] sm:$0xf]
      %v726 = vld [vmem:[%s4 + $0x34] sm:$0xf]
      %v727 = vld [vmem:[%s4 + $0x38] sm:$0xf]
      %v728 = vld [vmem:[%s4 + $0x3c] sm:$0xf]
      %v729 = vld [vmem:[%s5] sm:$0x1]
      %v731 = vperm.slane %v729, 0
      %v749 = vunpack.c.l.b16 %v713
      %v750 = vunpack.c.l.b16 %v714
      %v751 = vunpack.c.l.b16 %v715
      %v752 = vunpack.c.l.b16 %v716
      %v753 = vunpack.c.l.b16 %v717
      %v754 = vunpack.c.l.b16 %v718
      %v755 = vunpack.c.l.b16 %v719
      %v756 = vunpack.c.l.b16 %v720
      %v757 = vunpack.c.l.b16 %v721
      %v758 = vunpack.c.l.b16 %v722
      %v759 = vunpack.c.l.b16 %v723
      %v760 = vunpack.c.l.b16 %v724
      %v761 = vunpack.c.l.b16 %v725
      %v762 = vunpack.c.l.b16 %v726
      %v763 = vunpack.c.l.b16 %v727
      %v764 = vunpack.c.l.b16 %v728
      %v765 = vpack.c.b16 %v750, %v749
      %v766 = vpack.c.b16 %v752, %v751
      %v767 = vpack.c.b16 %v754, %v753
      %v768 = vpack.c.b16 %v756, %v755
      %v769 = vpack.c.b16 %v758, %v757
      %v770 = vpack.c.b16 %v760, %v759
      %v771 = vpack.c.b16 %v762, %v761
      %v772 = vpack.c.b16 %v764, %v763
      %781 = vmatpush.bf16.msra.mxu0 %v772
      %782 = vmatpush.bf16.msra.mxu0 %v771
      %783 = vmatpush.bf16.msra.mxu0 %v770
      %784 = vmatpush.bf16.msra.mxu0 %v769
      %785 = vmatpush.bf16.msra.mxu0 %v768
      %786 = vmatpush.bf16.msra.mxu0 %v767
      %787 = vmatpush.bf16.msra.mxu0 %v766
      %788 = vmatpush.bf16.msra.mxu0 %v765
      %789 = vmatmul.bf16.gmra.mxu0 %v705
      %v790 = vpop.f32.mrf.mxu0
      %v791 = vadd.f32 %v731, %v790
      %v792 = vpop.f32.mrf.mxu0
      %v793 = vadd.f32 %v731, %v792
      %794 = vmatmul.bf16.gmra.mxu0 %v706
      %v795 = vpop.f32.mrf.mxu0
      %v796 = vadd.f32 %v731, %v795
      %v797 = vpop.f32.mrf.mxu0
      %v798 = vadd.f32 %v731, %v797
      %799 = vmatmul.bf16.gmra.mxu0 %v707
      %v800 = vpop.f32.mrf.mxu0
      %v801 = vadd.f32 %v731, %v800
      %v802 = vpop.f32.mrf.mxu0
      %v803 = vadd.f32 %v731, %v802
      %804 = vmatmul.bf16.gmra.mxu0 %v708
      %v805 = vpop.f32.mrf.mxu0
      %v806 = vadd.f32 %v731, %v805
      %v807 = vpop.f32.mrf.mxu0
      %v808 = vadd.f32 %v731, %v807
      %809 = vmatmul.bf16.gmra.mxu0 %v709
      %v810 = vpop.f32.mrf.mxu0
      %v811 = vadd.f32 %v731, %v810
      %v812 = vpop.f32.mrf.mxu0
      %v813 = vadd.f32 %v731, %v812
      %814 = vmatmul.bf16.gmra.mxu0 %v710
      %v815 = vpop.f32.mrf.mxu0
      %v816 = vadd.f32 %v731, %v815
      %v817 = vpop.f32.mrf.mxu0
      %v818 = vadd.f32 %v731, %v817
      %819 = vmatmul.bf16.gmra.mxu0 %v711
      %v820 = vpop.f32.mrf.mxu0
      %v821 = vadd.f32 %v731, %v820
      %v822 = vpop.f32.mrf.mxu0
      %v823 = vadd.f32 %v731, %v822
      %824 = vmatmul.bf16.gmra.mxu0 %v712
      %v825 = vpop.f32.mrf.mxu0
      %v826 = vadd.f32 %v731, %v825
      %v827 = vpop.f32.mrf.mxu0
      %v828 = vadd.f32 %v731, %v827
      %829 = vdwg.mxu0
      %v830 = vmax.f32 %v791, 0.0
      %v831 = vmax.f32 %v793, 0.0
      %v832 = vmax.f32 %v796, 0.0
      %v833 = vmax.f32 %v798, 0.0
      %v834 = vmax.f32 %v801, 0.0
      %v835 = vmax.f32 %v803, 0.0
      %v836 = vmax.f32 %v806, 0.0
      %v837 = vmax.f32 %v808, 0.0
      %v838 = vmax.f32 %v811, 0.0
      %v839 = vmax.f32 %v813, 0.0
      %v840 = vmax.f32 %v816, 0.0
      %v841 = vmax.f32 %v818, 0.0
      %v842 = vmax.f32 %v821, 0.0
      %v843 = vmax.f32 %v823, 0.0
      %v844 = vmax.f32 %v826, 0.0
      %v845 = vmax.f32 %v828, 0.0
      %v846 = vadd.f32 %v689, %v830
      %v847 = vadd.f32 %v690, %v831
      %v848 = vadd.f32 %v691, %v832
      %v849 = vadd.f32 %v692, %v833
      %v850 = vadd.f32 %v693, %v834
      %v851 = vadd.f32 %v694, %v835
      %v852 = vadd.f32 %v695, %v836
      %v853 = vadd.f32 %v696, %v837
      %v854 = vadd.f32 %v697, %v838
      %v855 = vadd.f32 %v698, %v839
      %v856 = vadd.f32 %v699, %v840
      %v857 = vadd.f32 %v700, %v841
      %v858 = vadd.f32 %v701, %v842
      %v859 = vadd.f32 %v702, %v843
      %v860 = vadd.f32 %v703, %v844
      %v861 = vadd.f32 %v704, %v845
      %v862 = vpack.c.bf16 %v847, %v846
      %v863 = vpack.c.bf16 %v849, %v848
      %v864 = vpack.c.bf16 %v851, %v850
      %v865 = vpack.c.bf16 %v853, %v852
      %v866 = vpack.c.bf16 %v855, %v854
      %v867 = vpack.c.bf16 %v857, %v856
      %v868 = vpack.c.bf16 %v859, %v858
      %v869 = vpack.c.bf16 %v861, %v860
      %v870 = vld [vmem:[%s6] sm:$0xf]
      %v871 = vld [vmem:[%s6 + $0x4] sm:$0xf]
      %v872 = vld [vmem:[%s6 + $0x8] sm:$0xf]
      %v873 = vld [vmem:[%s6 + $0xc] sm:$0xf]
      %v874 = vld [vmem:[%s6 + $0x10] sm:$0xf]
      %v875 = vld [vmem:[%s6 + $0x14] sm:$0xf]
      %v876 = vld [vmem:[%s6 + $0x18] sm:$0xf]
      %v877 = vld [vmem:[%s6 + $0x1c] sm:$0xf]
      %v878 = vld [vmem:[%s6 + $0x20] sm:$0xf]
      %v879 = vld [vmem:[%s6 + $0x24] sm:$0xf]
      %v880 = vld [vmem:[%s6 + $0x28] sm:$0xf]
      %v881 = vld [vmem:[%s6 + $0x2c] sm:$0xf]
      %v882 = vld [vmem:[%s6 + $0x30] sm:$0xf]
      %v883 = vld [vmem:[%s6 + $0x34] sm:$0xf]
      %v884 = vld [vmem:[%s6 + $0x38] sm:$0xf]
      %v885 = vld [vmem:[%s6 + $0x3c] sm:$0xf]
      %v886 = vld [vmem:[%s7] sm:$0x1]
      %v888 = vperm.slane %v886, 0
      %v906 = vunpack.c.l.b16 %v870
      %v907 = vunpack.c.l.b16 %v871
      %v908 = vunpack.c.l.b16 %v872
      %v909 = vunpack.c.l.b16 %v873
      %v910 = vunpack.c.l.b16 %v874
      %v911 = vunpack.c.l.b16 %v875
      %v912 = vunpack.c.l.b16 %v876
      %v913 = vunpack.c.l.b16 %v877
      %v914 = vunpack.c.l.b16 %v878
      %v915 = vunpack.c.l.b16 %v879
      %v916 = vunpack.c.l.b16 %v880
      %v917 = vunpack.c.l.b16 %v881
      %v918 = vunpack.c.l.b16 %v882
      %v919 = vunpack.c.l.b16 %v883
      %v920 = vunpack.c.l.b16 %v884
      %v921 = vunpack.c.l.b16 %v885
      %v922 = vpack.c.b16 %v907, %v906
      %v923 = vpack.c.b16 %v909, %v908
      %v924 = vpack.c.b16 %v911, %v910
      %v925 = vpack.c.b16 %v913, %v912
      %v926 = vpack.c.b16 %v915, %v914
      %v927 = vpack.c.b16 %v917, %v916
      %v928 = vpack.c.b16 %v919, %v918
      %v929 = vpack.c.b16 %v921, %v920
      %938 = vmatpush.bf16.msra.mxu0 %v929
      %939 = vmatpush.bf16.msra.mxu0 %v928
      %940 = vmatpush.bf16.msra.mxu0 %v927
      %941 = vmatpush.bf16.msra.mxu0 %v926
      %942 = vmatpush.bf16.msra.mxu0 %v925
      %943 = vmatpush.bf16.msra.mxu0 %v924
      %944 = vmatpush.bf16.msra.mxu0 %v923
      %945 = vmatpush.bf16.msra.mxu0 %v922
      %946 = vmatmul.bf16.gmra.mxu0 %v862
      %v947 = vpop.f32.mrf.mxu0
      %v948 = vadd.f32 %v888, %v947
      %v949 = vpop.f32.mrf.mxu0
      %v950 = vadd.f32 %v888, %v949
      %951 = vmatmul.bf16.gmra.mxu0 %v863
      %v952 = vpop.f32.mrf.mxu0
      %v953 = vadd.f32 %v888, %v952
      %v954 = vpop.f32.mrf.mxu0
      %v955 = vadd.f32 %v888, %v954
      %956 = vmatmul.bf16.gmra.mxu0 %v864
      %v957 = vpop.f32.mrf.mxu0
      %v958 = vadd.f32 %v888, %v957
      %v959 = vpop.f32.mrf.mxu0
      %v960 = vadd.f32 %v888, %v959
      %961 = vmatmul.bf16.gmra.mxu0 %v865
      %v962 = vpop.f32.mrf.mxu0
      %v963 = vadd.f32 %v888, %v962
      %v964 = vpop.f32.mrf.mxu0
      %v965 = vadd.f32 %v888, %v964
      %966 = vmatmul.bf16.gmra.mxu0 %v866
      %v967 = vpop.f32.mrf.mxu0
      %v968 = vadd.f32 %v888, %v967
      %v969 = vpop.f32.mrf.mxu0
      %v970 = vadd.f32 %v888, %v969
      %971 = vmatmul.bf16.gmra.mxu0 %v867
      %v972 = vpop.f32.mrf.mxu0
      %v973 = vadd.f32 %v888, %v972
      %v974 = vpop.f32.mrf.mxu0
      %v975 = vadd.f32 %v888, %v974
      %976 = vmatmul.bf16.gmra.mxu0 %v868
      %v977 = vpop.f32.mrf.mxu0
      %v978 = vadd.f32 %v888, %v977
      %v979 = vpop.f32.mrf.mxu0
      %v980 = vadd.f32 %v888, %v979
      %981 = vmatmul.bf16.gmra.mxu0 %v869
      %v982 = vpop.f32.mrf.mxu0
      %v983 = vadd.f32 %v888, %v982
      %v984 = vpop.f32.mrf.mxu0
      %v985 = vadd.f32 %v888, %v984
      %986 = vdwg.mxu0
      %v987 = vsub.f32 0.0, %v948
      %v988 = vsub.f32 0.0, %v950
      %v989 = vsub.f32 0.0, %v953
      %v990 = vsub.f32 0.0, %v955
      %v991 = vsub.f32 0.0, %v958
      %v992 = vsub.f32 0.0, %v960
      %v993 = vsub.f32 0.0, %v963
      %v994 = vsub.f32 0.0, %v965
      %v995 = vsub.f32 0.0, %v968
      %v996 = vsub.f32 0.0, %v970
      %v997 = vsub.f32 0.0, %v973
      %v998 = vsub.f32 0.0, %v975
      %v999 = vsub.f32 0.0, %v978
      %v1000 = vsub.f32 0.0, %v980
      %v1001 = vsub.f32 0.0, %v983
      %v1002 = vsub.f32 0.0, %v985
      %v1003 = vmul.f32 %v987, 1.442695
      %v1004 = vpow.pop %v1003
      %v1005 = vmul.f32 %v988, 1.442695
      %v1006 = vpow.pop %v1005
      %v1007 = vmul.f32 %v989, 1.442695
      %v1008 = vpow.pop %v1007
      %v1009 = vmul.f32 %v990, 1.442695
      %v1010 = vpow.pop %v1009
      %v1011 = vmul.f32 %v991, 1.442695
      %v1012 = vpow.pop %v1011
      %v1013 = vmul.f32 %v992, 1.442695
      %v1014 = vpow.pop %v1013
      %v1015 = vmul.f32 %v993, 1.442695
      %v1016 = vpow.pop %v1015
      %v1017 = vmul.f32 %v994, 1.442695
      %v1018 = vpow.pop %v1017
      %v1019 = vmul.f32 %v995, 1.442695
      %v1020 = vpow.pop %v1019
      %v1021 = vmul.f32 %v996, 1.442695
      %v1022 = vpow.pop %v1021
      %v1023 = vmul.f32 %v997, 1.442695
      %v1024 = vpow.pop %v1023
      %v1025 = vmul.f32 %v998, 1.442695
      %v1026 = vpow.pop %v1025
      %v1027 = vmul.f32 %v999, 1.442695
      %v1028 = vpow.pop %v1027
      %v1029 = vmul.f32 %v1000, 1.442695
      %v1030 = vpow.pop %v1029
      %v1031 = vmul.f32 %v1001, 1.442695
      %v1032 = vpow.pop %v1031
      %v1033 = vmul.f32 %v1002, 1.442695
      %v1034 = vpow.pop %v1033
      %v1035 = vadd.f32 %v1004, 1.0
      %v1036 = vadd.f32 %v1006, 1.0
      %v1037 = vadd.f32 %v1008, 1.0
      %v1038 = vadd.f32 %v1010, 1.0
      %v1039 = vadd.f32 %v1012, 1.0
      %v1040 = vadd.f32 %v1014, 1.0
      %v1041 = vadd.f32 %v1016, 1.0
      %v1042 = vadd.f32 %v1018, 1.0
      %v1043 = vadd.f32 %v1020, 1.0
      %v1044 = vadd.f32 %v1022, 1.0
      %v1045 = vadd.f32 %v1024, 1.0
      %v1046 = vadd.f32 %v1026, 1.0
      %v1047 = vadd.f32 %v1028, 1.0
      %v1048 = vadd.f32 %v1030, 1.0
      %v1049 = vadd.f32 %v1032, 1.0
      %v1050 = vadd.f32 %v1034, 1.0
      %v1051 = vrcp.pop %v1035
      %v1052 = vmul.f32 %v1035, %v1051
      %v1053 = vsub.f32 1.0, %v1052
      %v1054 = vmul.f32 %v1051, %v1053
      %v1055 = vadd.f32 %v1051, %v1054
      %vm1056 = vweird.f32 %v1035
      %vm1057 = vweird.f32 %v1051
      %vm1058 = vmor %vm1056, %vm1057
      %v1059 = vsel %vm1058, %v1051, %v1055
      %v1060 = vand.u32 2147483647, %v1035
      %vm1061 = vcmp.eq.f32.partialorder %v1060, 8.507059e+37
      %v1062 = vand.u32 %v1035, 2147483648
      %v1063 = vor.u32 1.1754944e-38, %v1062
      %v1064 = vsel %vm1061, %v1063, %v1059
      %v1065 = vmul.f32 1.0, %v1064
      %v1066 = vrcp.pop %v1036
      %v1067 = vmul.f32 %v1036, %v1066
      %v1068 = vsub.f32 1.0, %v1067
      %v1069 = vmul.f32 %v1066, %v1068
      %v1070 = vadd.f32 %v1066, %v1069
      %vm1071 = vweird.f32 %v1036
      %vm1072 = vweird.f32 %v1066
      %vm1073 = vmor %vm1071, %vm1072
      %v1074 = vsel %vm1073, %v1066, %v1070
      %v1075 = vand.u32 2147483647, %v1036
      %vm1076 = vcmp.eq.f32.partialorder %v1075, 8.507059e+37
      %v1077 = vand.u32 %v1036, 2147483648
      %v1078 = vor.u32 1.1754944e-38, %v1077
      %v1079 = vsel %vm1076, %v1078, %v1074
      %v1080 = vmul.f32 1.0, %v1079
      %v1081 = vrcp.pop %v1037
      %v1082 = vmul.f32 %v1037, %v1081
      %v1083 = vsub.f32 1.0, %v1082
      %v1084 = vmul.f32 %v1081, %v1083
      %v1085 = vadd.f32 %v1081, %v1084
      %vm1086 = vweird.f32 %v1037
      %vm1087 = vweird.f32 %v1081
      %vm1088 = vmor %vm1086, %vm1087
      %v1089 = vsel %vm1088, %v1081, %v1085
      %v1090 = vand.u32 2147483647, %v1037
      %vm1091 = vcmp.eq.f32.partialorder %v1090, 8.507059e+37
      %v1092 = vand.u32 %v1037, 2147483648
      %v1093 = vor.u32 1.1754944e-38, %v1092
      %v1094 = vsel %vm1091, %v1093, %v1089
      %v1095 = vmul.f32 1.0, %v1094
      %v1096 = vrcp.pop %v1038
      %v1097 = vmul.f32 %v1038, %v1096
      %v1098 = vsub.f32 1.0, %v1097
      %v1099 = vmul.f32 %v1096, %v1098
      %v1100 = vadd.f32 %v1096, %v1099
      %vm1101 = vweird.f32 %v1038
      %vm1102 = vweird.f32 %v1096
      %vm1103 = vmor %vm1101, %vm1102
      %v1104 = vsel %vm1103, %v1096, %v1100
      %v1105 = vand.u32 2147483647, %v1038
      %vm1106 = vcmp.eq.f32.partialorder %v1105, 8.507059e+37
      %v1107 = vand.u32 %v1038, 2147483648
      %v1108 = vor.u32 1.1754944e-38, %v1107
      %v1109 = vsel %vm1106, %v1108, %v1104
      %v1110 = vmul.f32 1.0, %v1109
      %v1111 = vrcp.pop %v1039
      %v1112 = vmul.f32 %v1039, %v1111
      %v1113 = vsub.f32 1.0, %v1112
      %v1114 = vmul.f32 %v1111, %v1113
      %v1115 = vadd.f32 %v1111, %v1114
      %vm1116 = vweird.f32 %v1039
      %vm1117 = vweird.f32 %v1111
      %vm1118 = vmor %vm1116, %vm1117
      %v1119 = vsel %vm1118, %v1111, %v1115
      %v1120 = vand.u32 2147483647, %v1039
      %vm1121 = vcmp.eq.f32.partialorder %v1120, 8.507059e+37
      %v1122 = vand.u32 %v1039, 2147483648
      %v1123 = vor.u32 1.1754944e-38, %v1122
      %v1124 = vsel %vm1121, %v1123, %v1119
      %v1125 = vmul.f32 1.0, %v1124
      %v1126 = vrcp.pop %v1040
      %v1127 = vmul.f32 %v1040, %v1126
      %v1128 = vsub.f32 1.0, %v1127
      %v1129 = vmul.f32 %v1126, %v1128
      %v1130 = vadd.f32 %v1126, %v1129
      %vm1131 = vweird.f32 %v1040
      %vm1132 = vweird.f32 %v1126
      %vm1133 = vmor %vm1131, %vm1132
      %v1134 = vsel %vm1133, %v1126, %v1130
      %v1135 = vand.u32 2147483647, %v1040
      %vm1136 = vcmp.eq.f32.partialorder %v1135, 8.507059e+37
      %v1137 = vand.u32 %v1040, 2147483648
      %v1138 = vor.u32 1.1754944e-38, %v1137
      %v1139 = vsel %vm1136, %v1138, %v1134
      %v1140 = vmul.f32 1.0, %v1139
      %v1141 = vrcp.pop %v1041
      %v1142 = vmul.f32 %v1041, %v1141
      %v1143 = vsub.f32 1.0, %v1142
      %v1144 = vmul.f32 %v1141, %v1143
      %v1145 = vadd.f32 %v1141, %v1144
      %vm1146 = vweird.f32 %v1041
      %vm1147 = vweird.f32 %v1141
      %vm1148 = vmor %vm1146, %vm1147
      %v1149 = vsel %vm1148, %v1141, %v1145
      %v1150 = vand.u32 2147483647, %v1041
      %vm1151 = vcmp.eq.f32.partialorder %v1150, 8.507059e+37
      %v1152 = vand.u32 %v1041, 2147483648
      %v1153 = vor.u32 1.1754944e-38, %v1152
      %v1154 = vsel %vm1151, %v1153, %v1149
      %v1155 = vmul.f32 1.0, %v1154
      %v1156 = vrcp.pop %v1042
      %v1157 = vmul.f32 %v1042, %v1156
      %v1158 = vsub.f32 1.0, %v1157
      %v1159 = vmul.f32 %v1156, %v1158
      %v1160 = vadd.f32 %v1156, %v1159
      %vm1161 = vweird.f32 %v1042
      %vm1162 = vweird.f32 %v1156
      %vm1163 = vmor %vm1161, %vm1162
      %v1164 = vsel %vm1163, %v1156, %v1160
      %v1165 = vand.u32 2147483647, %v1042
      %vm1166 = vcmp.eq.f32.partialorder %v1165, 8.507059e+37
      %v1167 = vand.u32 %v1042, 2147483648
      %v1168 = vor.u32 1.1754944e-38, %v1167
      %v1169 = vsel %vm1166, %v1168, %v1164
      %v1170 = vmul.f32 1.0, %v1169
      %v1171 = vrcp.pop %v1043
      %v1172 = vmul.f32 %v1043, %v1171
      %v1173 = vsub.f32 1.0, %v1172
      %v1174 = vmul.f32 %v1171, %v1173
      %v1175 = vadd.f32 %v1171, %v1174
      %vm1176 = vweird.f32 %v1043
      %vm1177 = vweird.f32 %v1171
      %vm1178 = vmor %vm1176, %vm1177
      %v1179 = vsel %vm1178, %v1171, %v1175
      %v1180 = vand.u32 2147483647, %v1043
      %vm1181 = vcmp.eq.f32.partialorder %v1180, 8.507059e+37
      %v1182 = vand.u32 %v1043, 2147483648
      %v1183 = vor.u32 1.1754944e-38, %v1182
      %v1184 = vsel %vm1181, %v1183, %v1179
      %v1185 = vmul.f32 1.0, %v1184
      %v1186 = vrcp.pop %v1044
      %v1187 = vmul.f32 %v1044, %v1186
      %v1188 = vsub.f32 1.0, %v1187
      %v1189 = vmul.f32 %v1186, %v1188
      %v1190 = vadd.f32 %v1186, %v1189
      %vm1191 = vweird.f32 %v1044
      %vm1192 = vweird.f32 %v1186
      %vm1193 = vmor %vm1191, %vm1192
      %v1194 = vsel %vm1193, %v1186, %v1190
      %v1195 = vand.u32 2147483647, %v1044
      %vm1196 = vcmp.eq.f32.partialorder %v1195, 8.507059e+37
      %v1197 = vand.u32 %v1044, 2147483648
      %v1198 = vor.u32 1.1754944e-38, %v1197
      %v1199 = vsel %vm1196, %v1198, %v1194
      %v1200 = vmul.f32 1.0, %v1199
      %v1201 = vrcp.pop %v1045
      %v1202 = vmul.f32 %v1045, %v1201
      %v1203 = vsub.f32 1.0, %v1202
      %v1204 = vmul.f32 %v1201, %v1203
      %v1205 = vadd.f32 %v1201, %v1204
      %vm1206 = vweird.f32 %v1045
      %vm1207 = vweird.f32 %v1201
      %vm1208 = vmor %vm1206, %vm1207
      %v1209 = vsel %vm1208, %v1201, %v1205
      %v1210 = vand.u32 2147483647, %v1045
      %vm1211 = vcmp.eq.f32.partialorder %v1210, 8.507059e+37
      %v1212 = vand.u32 %v1045, 2147483648
      %v1213 = vor.u32 1.1754944e-38, %v1212
      %v1214 = vsel %vm1211, %v1213, %v1209
      %v1215 = vmul.f32 1.0, %v1214
      %v1216 = vrcp.pop %v1046
      %v1217 = vmul.f32 %v1046, %v1216
      %v1218 = vsub.f32 1.0, %v1217
      %v1219 = vmul.f32 %v1216, %v1218
      %v1220 = vadd.f32 %v1216, %v1219
      %vm1221 = vweird.f32 %v1046
      %vm1222 = vweird.f32 %v1216
      %vm1223 = vmor %vm1221, %vm1222
      %v1224 = vsel %vm1223, %v1216, %v1220
      %v1225 = vand.u32 2147483647, %v1046
      %vm1226 = vcmp.eq.f32.partialorder %v1225, 8.507059e+37
      %v1227 = vand.u32 %v1046, 2147483648
      %v1228 = vor.u32 1.1754944e-38, %v1227
      %v1229 = vsel %vm1226, %v1228, %v1224
      %v1230 = vmul.f32 1.0, %v1229
      %v1231 = vrcp.pop %v1047
      %v1232 = vmul.f32 %v1047, %v1231
      %v1233 = vsub.f32 1.0, %v1232
      %v1234 = vmul.f32 %v1231, %v1233
      %v1235 = vadd.f32 %v1231, %v1234
      %vm1236 = vweird.f32 %v1047
      %vm1237 = vweird.f32 %v1231
      %vm1238 = vmor %vm1236, %vm1237
      %v1239 = vsel %vm1238, %v1231, %v1235
      %v1240 = vand.u32 2147483647, %v1047
      %vm1241 = vcmp.eq.f32.partialorder %v1240, 8.507059e+37
      %v1242 = vand.u32 %v1047, 2147483648
      %v1243 = vor.u32 1.1754944e-38, %v1242
      %v1244 = vsel %vm1241, %v1243, %v1239
      %v1245 = vmul.f32 1.0, %v1244
      %v1246 = vrcp.pop %v1048
      %v1247 = vmul.f32 %v1048, %v1246
      %v1248 = vsub.f32 1.0, %v1247
      %v1249 = vmul.f32 %v1246, %v1248
      %v1250 = vadd.f32 %v1246, %v1249
      %vm1251 = vweird.f32 %v1048
      %vm1252 = vweird.f32 %v1246
      %vm1253 = vmor %vm1251, %vm1252
      %v1254 = vsel %vm1253, %v1246, %v1250
      %v1255 = vand.u32 2147483647, %v1048
      %vm1256 = vcmp.eq.f32.partialorder %v1255, 8.507059e+37
      %v1257 = vand.u32 %v1048, 2147483648
      %v1258 = vor.u32 1.1754944e-38, %v1257
      %v1259 = vsel %vm1256, %v1258, %v1254
      %v1260 = vmul.f32 1.0, %v1259
      %v1261 = vrcp.pop %v1049
      %v1262 = vmul.f32 %v1049, %v1261
      %v1263 = vsub.f32 1.0, %v1262
      %v1264 = vmul.f32 %v1261, %v1263
      %v1265 = vadd.f32 %v1261, %v1264
      %vm1266 = vweird.f32 %v1049
      %vm1267 = vweird.f32 %v1261
      %vm1268 = vmor %vm1266, %vm1267
      %v1269 = vsel %vm1268, %v1261, %v1265
      %v1270 = vand.u32 2147483647, %v1049
      %vm1271 = vcmp.eq.f32.partialorder %v1270, 8.507059e+37
      %v1272 = vand.u32 %v1049, 2147483648
      %v1273 = vor.u32 1.1754944e-38, %v1272
      %v1274 = vsel %vm1271, %v1273, %v1269
      %v1275 = vmul.f32 1.0, %v1274
      %v1276 = vrcp.pop %v1050
      %v1277 = vmul.f32 %v1050, %v1276
      %v1278 = vsub.f32 1.0, %v1277
      %v1279 = vmul.f32 %v1276, %v1278
      %v1280 = vadd.f32 %v1276, %v1279
      %vm1281 = vweird.f32 %v1050
      %vm1282 = vweird.f32 %v1276
      %vm1283 = vmor %vm1281, %vm1282
      %v1284 = vsel %vm1283, %v1276, %v1280
      %v1285 = vand.u32 2147483647, %v1050
      %vm1286 = vcmp.eq.f32.partialorder %v1285, 8.507059e+37
      %v1287 = vand.u32 %v1050, 2147483648
      %v1288 = vor.u32 1.1754944e-38, %v1287
      %v1289 = vsel %vm1286, %v1288, %v1284
      %v1290 = vmul.f32 1.0, %v1289
      %vm1291 = vcmask 15360
      %1292 = vst.msk [vmem:[%s329] sm:$0xff] %vm1291, %v1065
      %1293 = vst.msk [vmem:[%s329 + $0x8] sm:$0xff] %vm1291, %v1080
      %1294 = vst.msk [vmem:[%s329 + $0x10] sm:$0xff] %vm1291, %v1095
      %1295 = vst.msk [vmem:[%s329 + $0x18] sm:$0xff] %vm1291, %v1110
      %1296 = vst.msk [vmem:[%s329 + $0x20] sm:$0xff] %vm1291, %v1125
      %1297 = vst.msk [vmem:[%s329 + $0x28] sm:$0xff] %vm1291, %v1140
      %1298 = vst.msk [vmem:[%s329 + $0x30] sm:$0xff] %vm1291, %v1155
      %1299 = vst.msk [vmem:[%s329 + $0x38] sm:$0xff] %vm1291, %v1170
      %1300 = vst.msk [vmem:[%s329 + $0x40] sm:$0xff] %vm1291, %v1185
      %1301 = vst.msk [vmem:[%s329 + $0x48] sm:$0xff] %vm1291, %v1200
      %1302 = vst.msk [vmem:[%s329 + $0x50] sm:$0xff] %vm1291, %v1215
      %1303 = vst.msk [vmem:[%s329 + $0x58] sm:$0xff] %vm1291, %v1230
      %1304 = vst.msk [vmem:[%s329 + $0x60] sm:$0xff] %vm1291, %v1245
      %1305 = vst.msk [vmem:[%s329 + $0x68] sm:$0xff] %vm1291, %v1260
      %1306 = vst.msk [vmem:[%s329 + $0x70] sm:$0xff] %vm1291, %v1275
      %1307 = vst.msk [vmem:[%s329 + $0x78] sm:$0xff] %vm1291, %v1290
      %s1308 = smul.u32 16, %s19
      %p1309 = scmp.lt.s32.totalorder %s1308, 31
      %s1310 = scalar_select %p1309, %s1308, 31
      %s1311 = smul.addr %s1310, 8
      %s1312 = scalar_lea.vmem %s8, %s1311
      // Predicated region
      $region53: #{adjacency_detector_forward.1} parent=51 // pred_check
        %p1313 = pneg %p215
      $region54: #{adjacency_detector_forward.1} parent=51 // pred_check_branch
        %1315 = sbr.rel (%p1313) target = $region56
      $region55: #{adjacency_detector_forward.1} parent=51 // pred_region
        %s1316 = smul.u32 16, %s19
      $region56: #{adjacency_detector_forward.1} parent=51 // pred_fallthru
        _
    $region52: #{adjacency_detector_forward.1} parent=5 // pred_fallthru
      _
    %p1317 = scmp.le.s32.totalorder 2, %s14
    // Predicated region
    $region57: #{adjacency_detector_forward.1} parent=5 // pred_check
      %p1318 = pneg %p1317
    $region58: #{adjacency_detector_forward.1} parent=5 // pred_check_branch
      %1320 = sbr.rel (%p1318) target = $region60
    $region59: #{adjacency_detector_forward.1} parent=5 // pred_region
      %s1321 = ssub.s32 %s14, 2
      // Predicated region
      $region61: #{adjacency_detector_forward.1} parent=59 // pred_check
        %p1322 = pneg %p221
      $region62: #{adjacency_detector_forward.1} parent=59 // pred_check_branch
        %1324 = sbr.rel (%p1322) target = $region64
      $region63: #{adjacency_detector_forward.1} parent=59 // pred_region
        %s1325 = smul.u32 16, %s20
        %p1326 = scmp.lt.s32.totalorder %s1325, 31
        %s1327 = scalar_select %p1326, %s1325, 31
        %s1328 = smul.addr %s1327, 8
        %s1329 = scalar_lea.vmem %s8, %s1328
      $region64: #{adjacency_detector_forward.1} parent=59 // pred_fallthru
        _
    $region60: #{adjacency_detector_forward.1} parent=5 // pred_fallthru
      _
  $region6: #{adjacency_detector_forward.1} parent=0 // loop_footer
    %s18 = sadd.s32 1, %s14
  $region7: #{adjacency_detector_forward.1} parent=0 // loop_footer_branch
    %13 = sbr.rel target = $region3
  $region8: #{adjacency_detector_forward.1} parent=0 // loop_exit
    _

</llo_original>
